<compile_context>
chip_gen: v5e
topology: v5e:2x2
jax: 0.10.0
libtpu: 0.0.40
codegen_flags: <defaults>
</compile_context>

<pallas_src>
import jax
import jax.numpy as jnp
from jax.experimental import pallas as pl
from jax.experimental.pallas import tpu as pltpu


def linear_add_relu_kernel(x_ref, w_ref, b_ref, other_ref, o_ref):
    # x_ref:     (B, IN) f32 in VMEM
    # w_ref:     (IN,)   f32 in SMEM   (Linear weight for the single output unit)
    # b_ref:     (1,)    f32 in SMEM   (Linear bias)
    # other_ref: (1,)    f32 in SMEM   (the `other` addend, scalar)
    # o_ref:     (B, 1)  f32 in VMEM
    x = x_ref[...]                                   # (B, IN)
    in_features = x_ref.shape[1]

    # Contraction over IN as scalar-weighted column accumulate (VPU only; no MXU,
    # no padded weight DMA). IN is static, so this Python loop unrolls at trace time.
    acc = x[:, 0:1] * w_ref[0]                       # (B, 1)
    for i in range(1, in_features):
        acc = acc + x[:, i:i + 1] * w_ref[i]

    # bias + other done in-kernel (free in the scalar/vector slack).
    t2 = acc + b_ref[0] + other_ref[0]
    o_ref[...] = jnp.maximum(t2, 0.0).astype(o_ref.dtype)


def model_forward(x1, weight, bias, other):
    """x1: (B, IN) f32, weight: (OUT, IN) with OUT == 1, bias: (OUT,), other: scalar-like."""
    B, IN = x1.shape
    OUT, IN_w = weight.shape
    # Sanity-gate the assumptions this kernel relies on.
    assert OUT == 1, f"kernel assumes a single output unit, got OUT={OUT}"
    assert IN_w == IN, f"weight in_features {IN_w} != input features {IN}"
    assert other.size == 1, f"`other` must be scalar-broadcastable, got shape {other.shape}"

    w_flat = jnp.ravel(weight).astype(jnp.float32)       # (IN,)
    b_flat = jnp.ravel(bias).astype(jnp.float32)          # (1,)
    other_flat = jnp.ravel(other).astype(jnp.float32)     # (1,)

    return pl.pallas_call(
        linear_add_relu_kernel,
        out_shape=jax.ShapeDtypeStruct((B, OUT), jnp.float32),
        in_specs=[
            pl.BlockSpec(memory_space=pltpu.MemorySpace.VMEM),   # x1 (only VMEM DMA)
            pl.BlockSpec(memory_space=pltpu.MemorySpace.SMEM),   # weight (IN,)
            pl.BlockSpec(memory_space=pltpu.MemorySpace.SMEM),   # bias (1,)
            pl.BlockSpec(memory_space=pltpu.MemorySpace.SMEM),   # other (1,)
        ],
        out_specs=pl.BlockSpec(memory_space=pltpu.MemorySpace.VMEM),
    )(x1, w_flat, b_flat, other_flat)


if __name__ == "__main__":
    key = jax.random.PRNGKey(0)
    k_w, k_b, k_other = jax.random.split(key, 3)

    # Inputs per the PyTorch script: x1 = ones(1, 3), other = rand(1, 1)
    x1 = jnp.ones((1, 3), dtype=jnp.float32)
    other = jax.random.uniform(k_other, (1, 1), dtype=jnp.float32)

    # Deterministic Linear(3, 1) parameters (PyTorch default init: U(-1/sqrt(3), 1/sqrt(3)))
    bound = 1.0 / jnp.sqrt(3.0)
    weight = jax.random.uniform(k_w, (1, 3), minval=-bound, maxval=bound, dtype=jnp.float32)
    bias = jax.random.uniform(k_b, (1,), minval=-bound, maxval=bound, dtype=jnp.float32)

    out = model_forward(x1, weight, bias, other)
    jax.block_until_ready(out)

    # Cross-check against plain JAX reference (linear -> add -> relu).
    ref = jnp.maximum(x1 @ weight.T + bias[None, :] + other, 0.0)
    assert out.shape == ref.shape, (out.shape, ref.shape)
    assert jnp.allclose(out, ref, atol=1e-6), (out, ref)

    print("KERNEL_OK")
</pallas_src>

<mosaic_0001>
module attributes {stable_mosaic.version = 11 : i64} {
  func.func @linear_add_relu_kernel(%arg0: memref<1x3xf32, #tpu.memory_space<vmem>>, %arg1: memref<3xf32, #tpu.memory_space<smem>>, %arg2: memref<1xf32, #tpu.memory_space<smem>>, %arg3: memref<1xf32, #tpu.memory_space<smem>>, %arg4: memref<1x1xf32, #tpu.memory_space<vmem>>) attributes {dimension_semantics = [], scalar_prefetch = 0 : i64, scratch_operands = 0 : i64, tpu.core_type = #tpu.core_type<tc>} {
    %c0 = arith.constant 0 : index
    %c0_0 = arith.constant 0 : index
    %0 = vector.load %arg0[%c0, %c0_0] : memref<1x3xf32, #tpu.memory_space<vmem>>, vector<1x3xf32>
    %1 = vector.extract_strided_slice %0 {offsets = [0, 0], sizes = [1, 1], strides = [1, 1]} : vector<1x3xf32> to vector<1x1xf32>
    %c0_1 = arith.constant 0 : index
    %2 = memref.load %arg1[%c0_1] : memref<3xf32, #tpu.memory_space<smem>>
    %3 = vector.broadcast %2 : f32 to vector<1x1xf32>
    %4 = arith.mulf %1, %3 : vector<1x1xf32>
    %5 = vector.extract_strided_slice %0 {offsets = [0, 1], sizes = [1, 1], strides = [1, 1]} : vector<1x3xf32> to vector<1x1xf32>
    %c1 = arith.constant 1 : index
    %6 = memref.load %arg1[%c1] : memref<3xf32, #tpu.memory_space<smem>>
    %7 = vector.broadcast %6 : f32 to vector<1x1xf32>
    %8 = arith.mulf %5, %7 : vector<1x1xf32>
    %9 = arith.addf %4, %8 : vector<1x1xf32>
    %10 = vector.extract_strided_slice %0 {offsets = [0, 2], sizes = [1, 1], strides = [1, 1]} : vector<1x3xf32> to vector<1x1xf32>
    %c2 = arith.constant 2 : index
    %11 = memref.load %arg1[%c2] : memref<3xf32, #tpu.memory_space<smem>>
    %12 = vector.broadcast %11 : f32 to vector<1x1xf32>
    %13 = arith.mulf %10, %12 : vector<1x1xf32>
    %14 = arith.addf %9, %13 : vector<1x1xf32>
    %c0_2 = arith.constant 0 : index
    %15 = memref.load %arg2[%c0_2] : memref<1xf32, #tpu.memory_space<smem>>
    %16 = vector.broadcast %15 : f32 to vector<1x1xf32>
    %17 = arith.addf %14, %16 : vector<1x1xf32>
    %c0_3 = arith.constant 0 : index
    %18 = memref.load %arg3[%c0_3] : memref<1xf32, #tpu.memory_space<smem>>
    %19 = vector.broadcast %18 : f32 to vector<1x1xf32>
    %20 = arith.addf %17, %19 : vector<1x1xf32>
    %cst = arith.constant 0.000000e+00 : f32
    %21 = vector.broadcast %cst : f32 to vector<1x1xf32>
    %22 = arith.maximumf %20, %21 : vector<1x1xf32>
    %c0_4 = arith.constant 0 : index
    %c0_5 = arith.constant 0 : index
    %23 = vector.load %arg4[%c0_4, %c0_5] : memref<1x1xf32, #tpu.memory_space<vmem>>, vector<1x1xf32>
    tpu.vector_store %arg4[%c0_4, %c0_5], %22 {strides = array<i32>} : memref<1x1xf32, #tpu.memory_space<vmem>>, vector<1x1xf32>,
    return
  }
}

</mosaic_0001>

<llo_original>
// kernel: tpu_custom_call.1
$region0: #{tpu_custom_call.1}
  #allocation0 [shape = 'u32[]', space=smem, size = 0x4, offset = 0x4, fixed_abs, tag = 'smem constant byte address 0x4 - core index']
  #allocation1 [shape = 'u32[72,128]{1,0:T(1,128)}', space=vmem, size = 0x9000, scoped, tag = 'internal scratch']
  #allocation2 [shape = 'f32[1]{0:T(128)S(6)}', space=smem, size = 0x200, scoped, tag = 'scoped memory for tpu_custom_call.1']
  #allocation3 [shape = 'f32[1]{0:T(128)S(6)}', space=smem, size = 0x200, scoped, tag = 'scoped memory for tpu_custom_call.1']
  %s0 = inlined_call_operand.vmem [shape: f32[1,3], index: 0, kind: input, shape index: {}]
  %s1 = inlined_call_operand.vmem [shape: f32[3], index: 1, kind: input, shape index: {}]
  %s2 = inlined_call_operand.<no memory space> [shape: f32[1], index: 2, kind: input, shape index: {}]
  %s3 = inlined_call_operand.<no memory space> [shape: f32[1], index: 3, kind: input, shape index: {}]
  %s4 = inlined_call_operand.hbm [shape: f32[1,1], index: 4, kind: output, shape index: {}]
  %s5 = sld [smem:[#allocation0]]
  $region30: #{tpu_custom_call.1} parent=0
    _
  %s7 = ssub.s32 1, %s5
  %s8 = scalar_select 0, %s7, %s5
  %9 = sst [smem:[#allocation2]] %s2
  %10 = sst [smem:[#allocation3]] %s3
  $region1: #{tpu_custom_call.1} parent=0
    #allocation4 [shape = 'u8[512]{0}', space=smem, size = 0x200, scoped, tag = 'input window, operand 1, single buffered']
    #allocation5 [shape = 's32[1]{0}', space=sflag, size = 0x4, scoped, tag = 'scoped memory for tpu_custom_call.1']
    #allocation6 [shape = 's32[1]{0}', space=sflag, size = 0x4, scoped, tag = 'scoped memory for tpu_custom_call.1']
    #allocation7 [shape = 'u8[512]{0}', space=vmem, size = 0x400, scoped, tag = 'output window, operand 0, single buffered']
    %11 = vsyncpa [#allocation6], 0
    %12 = vsyncpa [#allocation5], 0
    // Predicated region
    $region2: #{tpu_custom_call.1} parent=1 // pred_check
      _
    $region3: #{tpu_custom_call.1} parent=1 // pred_check_branch
      %14 = sbr.rel (0) target = $region5
    $region4: #{tpu_custom_call.1} parent=1 // pred_region
      _
    $region5: #{tpu_custom_call.1} parent=1 // pred_fallthru
      _
    // Predicated region
    $region6: #{tpu_custom_call.1} parent=1 // pred_check
      _
    $region7: #{tpu_custom_call.1} parent=1 // pred_check_branch
      %16 = sbr.rel (0) target = $region9
    $region8: #{tpu_custom_call.1} parent=1 // pred_region
      %18 = vsyncadd [#allocation6], 0
      %s20 = sshll.u32 %s1, 4
      %s21 = int_to_ptr.vmem [resolvable:$true] %s20
      %23 = dma.vmem_to_smem %s21, 16, [#allocation4], [#allocation6]
    $region9: #{tpu_custom_call.1} parent=1 // pred_fallthru
      _
    // Predicated region
    $region10: #{tpu_custom_call.1} parent=1 // pred_check
      _
    $region11: #{tpu_custom_call.1} parent=1 // pred_check_branch
      %25 = sbr.rel (0) target = $region13
    $region12: #{tpu_custom_call.1} parent=1 // pred_region
      _
    $region13: #{tpu_custom_call.1} parent=1 // pred_fallthru
      _
    // Predicated region
    $region14: #{tpu_custom_call.1} parent=1 // pred_check
      _
    $region15: #{tpu_custom_call.1} parent=1 // pred_check_branch
      %27 = sbr.rel (0) target = $region17
    $region16: #{tpu_custom_call.1} parent=1 // pred_region
      _
    $region17: #{tpu_custom_call.1} parent=1 // pred_fallthru
      _
    // Predicated region
    $region18: #{tpu_custom_call.1} parent=1 // pred_check
      _
    $region19: #{tpu_custom_call.1} parent=1 // pred_check_branch
      %29 = sbr.rel (0) target = $region21
    $region20: #{tpu_custom_call.1} parent=1 // pred_region
      %31 = dma.done [#allocation6], 16
    $region21: #{tpu_custom_call.1} parent=1 // pred_fallthru
      _
    %32 = sfence
    %v33 = vld [vmem:[%s0] sm:$0x1]
    %s34 = sld [smem:[#allocation4]]
    %v35 = vstv %s34
    %v36 = vmul.f32 %v33, %v35
    %s37 = sld [smem:[#allocation4 + $0x1]]
    %v38 = vstv %s37
    %v39 = vmul.f32 %v33, %v38
    %41 = vrot.lane.b32.xlu0 %v39, 127
    %v42 = vpop.permute.xlu0 %41
    %v44 = vadd.f32 %v36, %v42
    %s45 = sld [smem:[#allocation4 + $0x2]]
    %v46 = vstv %s45
    %v47 = vmul.f32 %v33, %v46
    %49 = vrot.lane.b32.xlu0 %v47, 126
    %v50 = vpop.permute.xlu0 %49
    %v52 = vadd.f32 %v44, %v50
    %s53 = sld [smem:[#allocation2]]
    %v54 = vstv %s53
    %v55 = vadd.f32 %v52, %v54
    %s56 = sld [smem:[#allocation3]]
    %v57 = vstv %s56
    %v58 = vadd.f32 %v55, %v57
    %v59 = vmax.f32 %v58, 0.0
    %vm60 = vcmask 0
    %61 = vst.msk [vmem:[#allocation7] sm:$0x1] %vm60, %v59
    // Predicated region
    $region22: #{tpu_custom_call.1} parent=1 // pred_check
      _
    $region23: #{tpu_custom_call.1} parent=1 // pred_check_branch
      %63 = sbr.rel (0) target = $region25
    $region24: #{tpu_custom_call.1} parent=1 // pred_region
      %65 = vsyncadd [#allocation5], 0
      %s67 = sshll.u32 [#allocation7], 4
      %s68 = int_to_ptr.vmem [resolvable:$true] %s67
      %s69 = sshll.u32 %s4, 4
      %s70 = int_to_ptr.hbm [resolvable:$true] %s69
      %72 = dma.vmem_to_hbm [thread:$0]  %s68, 16, %s70, [#allocation5]
    $region25: #{tpu_custom_call.1} parent=1 // pred_fallthru
      _
    // Predicated region
    $region26: #{tpu_custom_call.1} parent=1 // pred_check
      _
    $region27: #{tpu_custom_call.1} parent=1 // pred_check_branch
      %74 = sbr.rel (0) target = $region29
    $region28: #{tpu_custom_call.1} parent=1 // pred_region
      %76 = dma.done [#allocation5], 16
    $region29: #{tpu_custom_call.1} parent=1 // pred_fallthru
      _
    %77 = vsyncpa [#allocation5], 1
    %78 = vsyncpa [#allocation6], 1

</llo_original>
